<compile_context>
chip_gen: v5e
topology: v5e:2x2
jax: 0.10.0
libtpu: 0.0.40
codegen_flags: <defaults>
</compile_context>

<pallas_src>
import jax
import jax.numpy as jnp
from jax.experimental import pallas as pl
from jax.experimental.pallas import tpu as pltpu

_LANES = 128      # vreg lane width: last dim of the slab
_SUBLANES = 8     # f32 sublane granularity


def _ceil_div(a, b):
    return -(-a // b)


def _round_up(a, b):
    return _ceil_div(a, b) * b


def _linear_kernel(w_ref, b_ref, x_ref, o_ref):
    """y = x * w + b on one lane-dense (tile_rows, 128) tile.

    w_ref, b_ref: (1, 1) f32 scalars in SMEM.
    x_ref, o_ref: (tile_rows, 128) tiles in VMEM.
    With in_features = out_features = 1, nn.Linear is exactly scale + shift.
    Compute in the input dtype (bf16 VALU on v6e/v7x; f32 everywhere).
    """
    x = x_ref[...]
    w = w_ref[0, 0].astype(x.dtype)
    b = b_ref[0, 0].astype(x.dtype)
    # TODO(synk): on v5e (no bf16 VALU) an explicit f32 upcast path could be
    # selected via pltpu.get_tpu_info(); Mosaic handles the promotion today.
    o_ref[...] = (x * w + b).astype(o_ref.dtype)


def linear1(x, weight, bias, *, block_rows=2048, min_pallas_elems=262144,
            force_pallas=False):
    """nn.Linear(1, 1) forward. x: (B, 1) -> (B, 1) = x @ W.T + b."""
    B = x.shape[0]
    out_dtype = x.dtype
    w_s = weight.reshape(()).astype(jnp.float32)
    b_s = bias.reshape(()).astype(jnp.float32)

    def xla_path(xs):
        # Exact same math as xs @ W.T + b for in_features = out_features = 1.
        return (xs.astype(jnp.float32) * w_s + b_s).astype(out_dtype)

    # Keep double-buffered input+output tiles well under the v7x 32 MiB
    # scoped-VMEM default (64 MiB physical): 8192 rows * 128 * 4B = 4 MiB/buf.
    block_rows = max(_SUBLANES, min(int(block_rows), 8192))

    B_main = (B // _LANES) * _LANES          # lane-aligned prefix
    tail = B - B_main

    # Small batches (or nothing lane-aligned): fused XLA is already at the
    # 1-read + 1-write roofline; the kernel only pays off on large streams.
    if (B < min_pallas_elems and not force_pallas) or B_main == 0:
        return xla_path(x)

    # ---- zero-copy lane-dense relayout --------------------------------
    # (B_main, 1) -> (rows, 128) is a pure bitcast reshape when tail == 0.
    x_main = x if tail == 0 else x[:B_main]
    rows = B_main // _LANES
    x2d = x_main.reshape(rows, _LANES)

    # ---- tile selection ------------------------------------------------
    tile_rows = block_rows
    if rows < 2 * tile_rows:
        # Ensure >= 2 grid steps when the data allows, so v7x's two
        # TensorCores both stream HBM (harmless on single-core v5e/v6e).
        tile_rows = max(_SUBLANES, _round_up(_ceil_div(rows, 2), _SUBLANES))
    if tile_rows >= rows:
        tile_rows = rows                      # single full-extent block
    grid = (pl.cdiv(rows, tile_rows),)        # last block masked if ragged

    w2d = w_s.reshape(1, 1)
    b2d = b_s.reshape(1, 1)

    y2d = pl.pallas_call(
        _linear_kernel,
        out_shape=jax.ShapeDtypeStruct((rows, _LANES), out_dtype),
        grid_spec=pltpu.PrefetchScalarGridSpec(
            num_scalar_prefetch=0,
            grid=grid,
            in_specs=[
                pl.BlockSpec((1, 1), lambda i: (0, 0),
                             memory_space=pltpu.SMEM),               # weight
                pl.BlockSpec((1, 1), lambda i: (0, 0),
                             memory_space=pltpu.SMEM),               # bias
                pl.BlockSpec((tile_rows, _LANES), lambda i: (i, 0)),  # x tile
            ],
            out_specs=pl.BlockSpec((tile_rows, _LANES), lambda i: (i, 0)),
        ),
        compiler_params=pltpu.CompilerParams(
            dimension_semantics=("parallel",),
        ),
    )(w2d, b2d, x2d)

    y_main = y2d.reshape(B_main, 1)           # zero-copy back to (B_main, 1)
    if tail == 0:
        return y_main
    # Ragged tail (< 128 elements) in plain XLA; concat is the only extra
    # pass and only occurs for non-lane-aligned batch sizes.
    y_tail = xla_path(x[B_main:])
    return jnp.concatenate([y_main, y_tail], axis=0)


if __name__ == "__main__":
    key = jax.random.PRNGKey(0)
    k_x1, k_x2, k_x3, k_w, k_b = jax.random.split(key, 5)

    # nn.Linear(1, 1) init: U(-1, 1) since fan_in = 1.
    weight = jax.random.uniform(k_w, (1, 1), jnp.float32, minval=-1.0, maxval=1.0)
    bias = jax.random.uniform(k_b, (1,), jnp.float32, minval=-1.0, maxval=1.0)

    def ref(xs):
        return xs @ weight.T + bias

    # 1) Lane-aligned batch (B % 128 == 0): zero-copy relayout, grid of 2
    #    steps (rows=32, tile=16) so the parallel axis is exercised.
    #    force_pallas=True only because the test batch is deliberately small.
    B1 = 4096
    x1 = jax.random.normal(k_x1, (B1, 1), dtype=jnp.float32)
    y1 = jax.block_until_ready(linear1(x1, weight, bias, force_pallas=True))
    assert y1.shape == (B1, 1)
    assert jnp.allclose(y1, ref(x1), atol=1e-6), "mismatch (aligned pallas path)"

    # 2) Ragged batch: main region (4992 elems, rows=39 -> masked last block)
    #    through the kernel, 8-element tail in XLA.
    B2 = 5000
    x2 = jax.random.normal(k_x2, (B2, 1), dtype=jnp.float32)
    y2 = jax.block_until_ready(linear1(x2, weight, bias, force_pallas=True))
    assert y2.shape == (B2, 1)
    assert jnp.allclose(y2, ref(x2), atol=1e-6), "mismatch (ragged pallas path)"

    # 3) Tiny batch with default dispatch: fused-XLA fallback, no launch.
    B3 = 16
    x3 = jax.random.normal(k_x3, (B3, 1), dtype=jnp.float32)
    y3 = jax.block_until_ready(linear1(x3, weight, bias))
    assert jnp.allclose(y3, ref(x3), atol=1e-6), "mismatch (fallback path)"

    print("KERNEL_OK")
</pallas_src>

<mosaic_0001>
module attributes {stable_mosaic.version = 11 : i64} {
  func.func @_linear_kernel(%arg0: i32, %arg1: memref<1x1xf32, #tpu.memory_space<smem>>, %arg2: memref<1x1xf32, #tpu.memory_space<smem>>, %arg3: memref<16x128xf32, #tpu.memory_space<vmem>>, %arg4: memref<16x128xf32, #tpu.memory_space<vmem>>) attributes {dimension_semantics = [#tpu.dimension_semantics<parallel>], iteration_bounds = array<i64: 2>, scalar_prefetch = 0 : i64, scratch_operands = 0 : i64, tpu.core_type = #tpu.core_type<tc>, window_params = [{transform_indices = @transform_0, window_bounds = array<i64: 1, 1>}, {transform_indices = @transform_1, window_bounds = array<i64: 1, 1>}, {transform_indices = @transform_2, window_bounds = array<i64: 16, 128>}, {transform_indices = @transform_3, window_bounds = array<i64: 16, 128>}]} {
    %c0 = arith.constant 0 : index
    %c0_0 = arith.constant 0 : index
    %0 = vector.load %arg3[%c0, %c0_0] : memref<16x128xf32, #tpu.memory_space<vmem>>, vector<16x128xf32>
    %c0_1 = arith.constant 0 : index
    %c0_2 = arith.constant 0 : index
    %1 = memref.load %arg1[%c0_1, %c0_2] : memref<1x1xf32, #tpu.memory_space<smem>>
    %c0_3 = arith.constant 0 : index
    %c0_4 = arith.constant 0 : index
    %2 = memref.load %arg2[%c0_3, %c0_4] : memref<1x1xf32, #tpu.memory_space<smem>>
    %3 = vector.broadcast %1 : f32 to vector<16x128xf32>
    %4 = arith.mulf %0, %3 : vector<16x128xf32>
    %5 = vector.broadcast %2 : f32 to vector<16x128xf32>
    %6 = arith.addf %4, %5 : vector<16x128xf32>
    %c0_5 = arith.constant 0 : index
    %c0_6 = arith.constant 0 : index
    %7 = vector.load %arg4[%c0_5, %c0_6] : memref<16x128xf32, #tpu.memory_space<vmem>>, vector<16x128xf32>
    tpu.vector_store %arg4[%c0_5, %c0_6], %6 {strides = array<i32>} : memref<16x128xf32, #tpu.memory_space<vmem>>, vector<16x128xf32>,
    return
  }
  func.func @transform_0(%arg0: i32) -> (i32, i32) {
    %c0_i32 = arith.constant 0 : i32
    %c0_i32_0 = arith.constant 0 : i32
    %c0_i32_1 = arith.constant 0 : i32
    return %c0_i32, %c0_i32_0 : i32, i32
  }
  func.func @transform_1(%arg0: i32) -> (i32, i32) {
    %c0_i32 = arith.constant 0 : i32
    %c0_i32_0 = arith.constant 0 : i32
    %c0_i32_1 = arith.constant 0 : i32
    return %c0_i32, %c0_i32_0 : i32, i32
  }
  func.func @transform_2(%arg0: i32) -> (i32, i32) {
    %c0_i32 = arith.constant 0 : i32
    %c0_i32_0 = arith.constant 0 : i32
    return %arg0, %c0_i32 : i32, i32
  }
  func.func @transform_3(%arg0: i32) -> (i32, i32) {
    %c0_i32 = arith.constant 0 : i32
    %c0_i32_0 = arith.constant 0 : i32
    return %arg0, %c0_i32 : i32, i32
  }
}

</mosaic_0001>

<llo_original>
// kernel: tpu_custom_call.1
$region0: #{tpu_custom_call.1}
  #allocation0 [shape = 'u32[]', space=smem, size = 0x4, offset = 0x4, fixed_abs, tag = 'smem constant byte address 0x4 - core index']
  #allocation1 [shape = 'u32[72,128]{1,0:T(1,128)}', space=vmem, size = 0x9000, scoped, tag = 'internal scratch']
  #allocation2 [shape = 'f32[1,1]{1,0:T(1,128)S(6)}', space=smem, size = 0x200, scoped, tag = 'scoped memory for tpu_custom_call.1']
  #allocation3 [shape = 'f32[1,1]{1,0:T(1,128)S(6)}', space=smem, size = 0x200, scoped, tag = 'scoped memory for tpu_custom_call.1']
  %s0 = inlined_call_operand.<no memory space> [shape: f32[1,1], index: 0, kind: input, shape index: {}]
  %s1 = inlined_call_operand.<no memory space> [shape: f32[1,1], index: 1, kind: input, shape index: {}]
  %s2 = inlined_call_operand.hbm [shape: f32[32,128], index: 2, kind: input, shape index: {}]
  %s3 = inlined_call_operand.hbm [shape: f32[32,128], index: 3, kind: output, shape index: {}]
  %s4 = sld [smem:[#allocation0]]
  $region49: #{tpu_custom_call.1} parent=0
    _
  %s6 = ssub.s32 1, %s4
  %s7 = scalar_select 0, %s6, %s4
  %8 = sst [smem:[#allocation2]] %s0
  %9 = sst [smem:[#allocation3]] %s1
  $region1: #{tpu_custom_call.1} parent=0
    #allocation4 [shape = 'u8[16384]{0}', space=vmem, size = 0x4000, scoped, tag = 'input window, operand 2']
    #allocation5 [shape = 's32[2]{0}', space=sflag, size = 0x8, scoped, tag = 'scoped memory for tpu_custom_call.1']
    #allocation6 [shape = 's32[2]{0}', space=sflag, size = 0x8, scoped, tag = 'scoped memory for tpu_custom_call.1']
    #allocation7 [shape = 'u8[16384]{0}', space=vmem, size = 0x4000, scoped, tag = 'output window, operand 0']
    %10 = vsyncpa [#allocation5], 0
    %s11 = scalar_lea.sflag [#allocation5], 1
    %12 = vsyncpa %s11, 0
    %13 = vsyncpa [#allocation6], 0
    %s14 = scalar_lea.sflag [#allocation6], 1
    %15 = vsyncpa %s14, 0
    loop: start=0, step=1, limit=4
    $region2: #{tpu_custom_call.1} parent=1 // loop_pre_header
      _
    $region3: #{tpu_custom_call.1} parent=1 // loop_header
      %s17 = sphi 0, %s21
      %p18 = scmp.ge.s32.totalorder %s17, 4
      %s25 = sphi 0, %s25
      %s27 = sphi 0, %s25
      %s28 = sphi 0, %s27
      %s42 = sphi 0, %s28
      %s46 = sphi 0, %s46
      %s48 = sphi 0, %s46
      %s49 = sphi 0, %s48
      %s63 = sphi 0, %s49
      %s69 = sphi 0, %s71
      %s72 = sphi 0, %s69
      %s73 = sphi 0, %s72
      %s89 = sphi 0, %s73
      %s95 = sphi 0, %s97
      %s98 = sphi 0, %s95
      %s99 = sphi 0, %s98
      %s115 = sphi 0, %s99
    $region4: #{tpu_custom_call.1} parent=1 // loop_header_branch
      %20 = sbr.rel (%p18) target = $region8
    $region5: #{tpu_custom_call.1} parent=1 // loop_body
      %s22 = ssub.s32 %s17, 1
      %s23 = ssub.s32 %s17, 2
      %s24 = sadd.s32 %s17, 1
      %s26 = sadd.s32 %s25, 1
      %p29 = scmp.eq.s32.totalorder %s17, 1
      %p30 = scmp.ne.s32.totalorder %s25, %s27
      %p31 = scmp.eq.s32.totalorder %s17, 0
      %p32 = por %p30, %p31
      %p33 = scmp.ne.s32.totalorder %s25, %s27
      %p34 = scmp.eq.s32.totalorder %s22, 1
      %p35 = por %p33, %p34
      %p36 = scmp.ne.s32.totalorder %s27, %s28
      %p37 = scmp.eq.s32.totalorder %s22, 0
      %p38 = por %p36, %p37
      %p39 = scmp.ne.s32.totalorder %s27, %s28
      %p40 = scmp.eq.s32.totalorder %s23, 1
      %p41 = por %p39, %p40
      %p43 = scmp.ne.s32.totalorder %s28, %s42
      %p44 = scmp.eq.s32.totalorder %s23, 0
      %p45 = por %p43, %p44
      %s47 = sadd.s32 %s46, 1
      %p50 = scmp.eq.s32.totalorder %s17, 1
      %p51 = scmp.ne.s32.totalorder %s46, %s48
      %p52 = scmp.eq.s32.totalorder %s17, 0
      %p53 = por %p51, %p52
      %p54 = scmp.ne.s32.totalorder %s46, %s48
      %p55 = scmp.eq.s32.totalorder %s22, 1
      %p56 = por %p54, %p55
      %p57 = scmp.ne.s32.totalorder %s48, %s49
      %p58 = scmp.eq.s32.totalorder %s22, 0
      %p59 = por %p57, %p58
      %p60 = scmp.ne.s32.totalorder %s48, %s49
      %p61 = scmp.eq.s32.totalorder %s23, 1
      %p62 = por %p60, %p61
      %p64 = scmp.ne.s32.totalorder %s49, %s63
      %p65 = scmp.eq.s32.totalorder %s23, 0
      %p66 = por %p64, %p65
      %s67 = ssub.s32 %s17, %s24
      %p68 = scmp.eq.s32.totalorder %s67, 0
      %s70 = sadd.s32 %s69, 1
      %s71 = scalar_select %p68, %s69, %s70
      %p74 = pneg %p68
      %p75 = scmp.eq.s32.totalorder %s17, 1
      %p76 = por %p74, %p75
      %p77 = scmp.ne.s32.totalorder %s69, %s72
      %p78 = scmp.eq.s32.totalorder %s17, 0
      %p79 = por %p77, %p78
      %p80 = scmp.ne.s32.totalorder %s69, %s72
      %p81 = scmp.eq.s32.totalorder %s22, 1
      %p82 = por %p80, %p81
      %p83 = scmp.ne.s32.totalorder %s72, %s73
      %p84 = scmp.eq.s32.totalorder %s22, 0
      %p85 = por %p83, %p84
      %p86 = scmp.ne.s32.totalorder %s72, %s73
      %p87 = scmp.eq.s32.totalorder %s23, 1
      %p88 = por %p86, %p87
      %p90 = scmp.ne.s32.totalorder %s73, %s89
      %p91 = scmp.eq.s32.totalorder %s23, 0
      %p92 = por %p90, %p91
      %s93 = ssub.s32 %s17, %s24
      %p94 = scmp.eq.s32.totalorder %s93, 0
      %s96 = sadd.s32 %s95, 1
      %s97 = scalar_select %p94, %s95, %s96
      %p100 = pneg %p94
      %p101 = scmp.eq.s32.totalorder %s17, 1
      %p102 = por %p100, %p101
      %p103 = scmp.ne.s32.totalorder %s95, %s98
      %p104 = scmp.eq.s32.totalorder %s17, 0
      %p105 = por %p103, %p104
      %p106 = scmp.ne.s32.totalorder %s95, %s98
      %p107 = scmp.eq.s32.totalorder %s22, 1
      %p108 = por %p106, %p107
      %p109 = scmp.ne.s32.totalorder %s98, %s99
      %p110 = scmp.eq.s32.totalorder %s22, 0
      %p111 = por %p109, %p110
      %p112 = scmp.ne.s32.totalorder %s98, %s99
      %p113 = scmp.eq.s32.totalorder %s23, 1
      %p114 = por %p112, %p113
      %p116 = scmp.ne.s32.totalorder %s99, %s115
      %p117 = scmp.eq.s32.totalorder %s23, 0
      %p118 = por %p116, %p117
      %p119 = scmp.le.s32.totalorder 1, %s17
      %p120 = scmp.lt.s32.totalorder %s17, 3
      %p121 = pnand %p119, %p120
      %p122 = pneg %p121
      // Predicated region
      $region9: #{tpu_custom_call.1} parent=5 // pred_check
        _
      $region10: #{tpu_custom_call.1} parent=5 // pred_check_branch
        %124 = sbr.rel (%p121) target = $region12
      $region11: #{tpu_custom_call.1} parent=5 // pred_region
        %s125 = ssub.s32 %s17, 1
        // Predicated region
        $region13: #{tpu_custom_call.1} parent=11 // pred_check
          %p126 = pneg %p38
        $region14: #{tpu_custom_call.1} parent=11 // pred_check_branch
          %128 = sbr.rel (%p126) target = $region16
        $region15: #{tpu_custom_call.1} parent=11 // pred_region
          _
        $region16: #{tpu_custom_call.1} parent=11 // pred_fallthru
          _
        // Predicated region
        $region17: #{tpu_custom_call.1} parent=11 // pred_check
          %p129 = pneg %p59
        $region18: #{tpu_custom_call.1} parent=11 // pred_check_branch
          %131 = sbr.rel (%p129) target = $region20
        $region19: #{tpu_custom_call.1} parent=11 // pred_region
          _
        $region20: #{tpu_custom_call.1} parent=11 // pred_fallthru
          _
      $region12: #{tpu_custom_call.1} parent=5 // pred_fallthru
        _
      %p132 = scmp.lt.s32.totalorder %s17, 2
      // Predicated region
      $region21: #{tpu_custom_call.1} parent=5 // pred_check
        %p133 = pneg %p132
      $region22: #{tpu_custom_call.1} parent=5 // pred_check_branch
        %135 = sbr.rel (%p133) target = $region24
      $region23: #{tpu_custom_call.1} parent=5 // pred_region
        // Predicated region
        $region25: #{tpu_custom_call.1} parent=23 // pred_check
          %p136 = pneg %p79
        $region26: #{tpu_custom_call.1} parent=23 // pred_check_branch
          %138 = sbr.rel (%p136) target = $region28
        $region27: #{tpu_custom_call.1} parent=23 // pred_region
          %s139 = sand.u32 %s69, 1
          %s140 = scalar_lea.sflag [#allocation5], %s139
          %s141 = sand.u32 %s69, 1
          %s142 = smul.addr %s141, 16
          %s143 = scalar_lea.vmem [#allocation4], %s142
          %s144 = smul.u32 2, %s17
          %146 = vsyncadd %s140, 0
          %s147 = smul.addr %s144, 8
          %s148 = scalar_lea.hbm %s2, %s147
          %s149 = sshll.u32 %s148, 4
          %s150 = int_to_ptr.hbm [resolvable:$true] %s149
          %s151 = sshll.u32 %s143, 4
          %s152 = int_to_ptr.vmem [resolvable:$true] %s151
          %157 = dma.hbm_to_vmem [thread:$0]  %s150, 256, %s152, %s140, 128, 128, 8
        $region28: #{tpu_custom_call.1} parent=23 // pred_fallthru
          _
      $region24: #{tpu_custom_call.1} parent=5 // pred_fallthru
        _
      %p158 = scmp.le.s32.totalorder 1, %s17
      %p159 = scmp.lt.s32.totalorder %s17, 3
      %p160 = pnand %p158, %p159
      %p161 = pneg %p160
      // Predicated region
      $region29: #{tpu_custom_call.1} parent=5 // pred_check
        _
      $region30: #{tpu_custom_call.1} parent=5 // pred_check_branch
        %163 = sbr.rel (%p160) target = $region32
      $region31: #{tpu_custom_call.1} parent=5 // pred_region
        %s164 = ssub.s32 %s17, 1
        %s165 = sand.u32 %s72, 1
        %s166 = scalar_lea.sflag [#allocation5], %s165
        %s167 = sand.u32 %s72, 1
        %s168 = smul.addr %s167, 16
        %s169 = scalar_lea.vmem [#allocation4], %s168
        // Predicated region
        $region33: #{tpu_custom_call.1} parent=31 // pred_check
          %p170 = pneg %p85
        $region34: #{tpu_custom_call.1} parent=31 // pred_check_branch
          %172 = sbr.rel (%p170) target = $region36
        $region35: #{tpu_custom_call.1} parent=31 // pred_region
          %174 = dma.done %s166, 256
        $region36: #{tpu_custom_call.1} parent=31 // pred_fallthru
          _
        %p175 = pneg %p38
        %p176 = pneg %p35
        %p177 = pneg %p59
        %p178 = pneg %p56
        %s179 = sand.u32 %s72, 1
        %s180 = scalar_lea.sflag [#allocation5], %s179
        %s181 = sand.u32 %s72, 1
        %s182 = smul.addr %s181, 16
        %s183 = scalar_lea.vmem [#allocation4], %s182
        %p184 = pneg %p85
        %p185 = pneg %p82
        %p186 = pneg %p111
        %p187 = pneg %p108
        %s188 = sand.u32 %s98, 1
        %s189 = scalar_lea.sflag [#allocation6], %s188
        %s190 = sand.u32 %s98, 1
        %s191 = smul.addr %s190, 16
        %s192 = scalar_lea.vmem [#allocation7], %s191
        %s193 = smul.u32 2, %s22
        %s194 = smul.u32 2, %s22
        %v195 = vld [vmem:[%s169] sm:$0xff]
        %v196 = vld [vmem:[%s169 + $0x8] sm:$0xff]
        %s197 = sld [smem:[#allocation2]]
        %s198 = sld [smem:[#allocation3]]
        %v199 = vstv %s197
        %v200 = vmul.f32 %v195, %v199
        %v201 = vmul.f32 %v196, %v199
        %v202 = vstv %s198
        %v203 = vadd.f32 %v200, %v202
        %v204 = vadd.f32 %v201, %v202
        %205 = vst [vmem:[%s192] sm:$0xff] %v203
        %206 = vst [vmem:[%s192 + $0x8] sm:$0xff] %v204
        %s207 = sand.u32 %s98, 1
        %s208 = scalar_lea.sflag [#allocation6], %s207
        %s209 = sand.u32 %s98, 1
        %s210 = smul.addr %s209, 16
        %s211 = scalar_lea.vmem [#allocation7], %s210
        // Predicated region
        $region37: #{tpu_custom_call.1} parent=31 // pred_check
          %p212 = pneg %p108
        $region38: #{tpu_custom_call.1} parent=31 // pred_check_branch
          %214 = sbr.rel (%p212) target = $region40
        $region39: #{tpu_custom_call.1} parent=31 // pred_region
          %s215 = smul.u32 2, %s22
          %217 = vsyncadd %s208, 0
          %s218 = smul.addr %s215, 8
          %s219 = scalar_lea.hbm %s3, %s218
          %s220 = sshll.u32 %s211, 4
          %s221 = int_to_ptr.vmem [resolvable:$true] %s220
          %s222 = sshll.u32 %s219, 4
          %s223 = int_to_ptr.hbm [resolvable:$true] %s222
          %228 = dma.vmem_to_hbm [thread:$0]  %s221, 256, %s223, %s208, 128, 128, 8
        $region40: #{tpu_custom_call.1} parent=31 // pred_fallthru
          _
      $region32: #{tpu_custom_call.1} parent=5 // pred_fallthru
        _
      %p229 = scmp.le.s32.totalorder 2, %s17
      // Predicated region
      $region41: #{tpu_custom_call.1} parent=5 // pred_check
        %p230 = pneg %p229
      $region42: #{tpu_custom_call.1} parent=5 // pred_check_branch
        %232 = sbr.rel (%p230) target = $region44
      $region43: #{tpu_custom_call.1} parent=5 // pred_region
        %s233 = ssub.s32 %s17, 2
        // Predicated region
        $region45: #{tpu_custom_call.1} parent=43 // pred_check
          %p234 = pneg %p114
        $region46: #{tpu_custom_call.1} parent=43 // pred_check_branch
          %236 = sbr.rel (%p234) target = $region48
        $region47: #{tpu_custom_call.1} parent=43 // pred_region
          %s237 = sand.u32 %s99, 1
          %s238 = scalar_lea.sflag [#allocation6], %s237
          %s239 = sand.u32 %s99, 1
          %s240 = smul.addr %s239, 16
          %s241 = scalar_lea.vmem [#allocation7], %s240
          %243 = dma.done %s238, 256
        $region48: #{tpu_custom_call.1} parent=43 // pred_fallthru
          _
      $region44: #{tpu_custom_call.1} parent=5 // pred_fallthru
        _
    $region6: #{tpu_custom_call.1} parent=1 // loop_footer
      %s21 = sadd.s32 1, %s17
    $region7: #{tpu_custom_call.1} parent=1 // loop_footer_branch
      %16 = sbr.rel target = $region3
    $region8: #{tpu_custom_call.1} parent=1 // loop_exit
      _
    %244 = vsyncpa [#allocation5], 1
    %s245 = scalar_lea.sflag [#allocation5], 1
    %246 = vsyncpa %s245, 1
    %247 = vsyncpa [#allocation6], 1
    %s248 = scalar_lea.sflag [#allocation6], 1
    %249 = vsyncpa %s248, 1

</llo_original>
